<compile_context>
chip_gen: v5e
topology: v5e:2x2
jax: 0.10.0
libtpu: 0.0.40
codegen_flags: <defaults>
</compile_context>

<pallas_src>
import functools

import jax
import jax.numpy as jnp
from jax.experimental import pallas as pl
from jax.experimental.pallas import tpu as pltpu


# ---------------------------------------------------------------------------
# Parameter / glue setup (plain JAX)
# ---------------------------------------------------------------------------
def gaussian_2d(shape, center=None, sigma=1.0, min_value=0.0, max_value=1.0):
    """JAX port of the PyTorch gaussian_2d helper (deterministic, no params)."""
    if center is None:
        center = [shape[0] // 2 - 1, shape[1] // 2 - 1]
    x = jnp.arange(shape[0], dtype=jnp.float32)
    y = jnp.arange(shape[1], dtype=jnp.float32)
    X, Y = jnp.meshgrid(x, y, indexing="ij")
    dist = jnp.sqrt((X - center[0]) ** 2 + (Y - center[1]) ** 2)
    g = jnp.exp(-(dist ** 2) / (2.0 * sigma ** 2))
    upper_left = g[: center[0] + 1, : center[1] + 1]
    upper_right = jnp.flip(upper_left, axis=1)
    lower_left = jnp.flip(upper_left, axis=0)
    lower_right = jnp.flip(lower_left, axis=1)
    gmax = upper_left.max()
    gmin = upper_left.min()
    g = g.at[: center[0] + 1, -(center[1] + 1):].set(upper_right)
    g = g.at[-(center[0] + 1):, : center[1] + 1].set(lower_left)
    g = g.at[-(center[0] + 1):, -(center[1] + 1):].set(lower_right)
    mult = (max_value - min_value) / (gmax - gmin)
    return min_value + (g - gmin) * mult


def _band_matrix(n, radius, dtype=jnp.float32):
    """Banded ones matrix B[i, j] = 1 iff |i - j| <= radius ('same' box sum)."""
    idx = jnp.arange(n)
    return (jnp.abs(idx[:, None] - idx[None, :]) <= radius).astype(dtype)


# ---------------------------------------------------------------------------
# Pallas kernel
# ---------------------------------------------------------------------------
def _wbce_kernel(*refs, wp, wn, blur_k, use_blur, use_gauss, hard_labels,
                 slab_out):
    it = iter(refs)
    x_ref = next(it)                       # (TB, H, W) probabilities
    t_ref = next(it)                       # (TB, H, W) labels
    bh_ref = next(it) if use_blur else None
    bw_ref = next(it) if use_blur else None
    g_ref = next(it) if use_gauss else None
    out_ref = next(it)

    x = x_ref[...].astype(jnp.float32)
    t = t_ref[...].astype(jnp.float32)
    tb, H, W = x.shape

    if hard_labels:
        # Single-log fast path (exact when targets are exactly 0/1): halves
        # the EUP (transcendental) pushes per element.
        pos = t > 0.5
        p = jnp.where(pos, x, 1.0 - x)
        wgt = jnp.where(pos, wp, wn)
        loss = -wgt * jnp.log(p + 1e-8)
    else:
        # Two-log form: exact for soft labels as well (matches PyTorch).
        loss = -(wp * t * jnp.log(x + 1e-8)
                 + wn * (1.0 - t) * jnp.log(1.0 - x + 1e-8))

    if use_blur:
        # Separable 'same' zero-padded box-sum on the MXU:
        #   conv[b] = Bh @ t[b] @ Bw   with banded ones matrices Bh, Bw.
        bw = bw_ref[...]                                   # (W, W)
        bh = bh_ref[...]                                   # (H, H)
        # W pass: one lane-dense 2-D matmul over all rows of the block.
        cw = jnp.dot(t.reshape(tb * H, W), bw,
                     preferred_element_type=jnp.float32)
        cw = cw.reshape(tb, H, W)
        # H pass: batched (TB,H,H) @ (TB,H,W) matmul (band matrix broadcast
        # once per grid step — cheap, and keeps the result in (b, h, w) order
        # with no transposes).
        bh_b = jnp.broadcast_to(bh[None], (tb, H, H))
        conv = jax.lax.dot_general(
            bh_b, cw,
            dimension_numbers=(((2,), (1,)), ((0,), (0,))),
            preferred_element_type=jnp.float32)            # (TB, H, W)
        # blur_pass = 1 + (conv / k^2) * (t < 0.5); fold 1/k^2 into the mask.
        inv_k2 = 1.0 / float(blur_k * blur_k)
        blur_pass = 1.0 + conv * jnp.where(t < 0.5, inv_k2, 0.0)
        loss = loss * blur_pass

    if use_gauss:
        loss = loss * g_ref[...][None, :, :]

    if slab_out:
        # Lane-dense (8,128) partial-sum slab: leading-axis (VALU) adds only,
        # unmasked stores.  Wrapper finishes with jnp.sum(partials).
        out_ref[...] = loss.reshape(-1, 8, 128).sum(axis=0)[None]
    else:
        # Fallback for shapes not divisible into (8,128) slabs (e.g. tiny
        # test images): scalar partial sum broadcast into the block; wrapper
        # reads partials[:, 0, 0].
        out_ref[...] = jnp.full((1, 8, 128), jnp.sum(loss), jnp.float32)


# ---------------------------------------------------------------------------
# Wrapper
# ---------------------------------------------------------------------------
def _pick_batch_tile(n, h, w, plane_budget_bytes):
    """Largest divisor of n whose (tb, h, w) f32 block fits the budget, while
    guaranteeing at least 2 grid blocks when n >= 2 (v7x has 2 TensorCores)."""
    plane = h * w * 4
    tb_cap = max(1, plane_budget_bytes // max(plane, 1))
    if n >= 2:
        tb_cap = min(tb_cap, n // 2)
    tb = max(1, min(n, tb_cap))
    while n % tb != 0:
        tb -= 1
    return tb


def weighted_bce_loss2(input_logits, target, *, weight_positive, weight_negative,
                       gauss_params=None, blur_use=True, blur_size=9,
                       hard_labels=False, batch_tile=None,
                       plane_budget_bytes=None):
    """input_logits / target: (N, 1, H, W).  NOTE: despite the name (kept from
    the PyTorch module), input_logits are consumed as probabilities."""
    N, C, H, W = input_logits.shape
    assert C == 1, "blur conv weight is (1,1,k,k) -> single-channel input"

    x = input_logits.reshape(N, H, W).astype(jnp.float32)
    t = target.reshape(N, H, W).astype(jnp.float32)

    use_gauss = gauss_params is not None
    use_blur = bool(blur_use)

    # Per-generation tile budget / VMEM limit.
    try:
        vmem_cap = int(pltpu.get_tpu_info().vmem_capacity_bytes)
    except Exception:
        vmem_cap = 64 << 20
    if plane_budget_bytes is None:
        plane_budget_bytes = (2 << 20) if vmem_cap <= (64 << 20) else (4 << 20)

    tb = batch_tile if batch_tile is not None else _pick_batch_tile(
        N, H, W, plane_budget_bytes)
    assert N % tb == 0
    num_blocks = N // tb
    slab_out = (tb * H * W) % (8 * 128) == 0

    # Operands / specs built conditionally: no dead DMAs when a feature is off.
    operands = [x, t]
    in_specs = [pl.BlockSpec((tb, H, W), lambda n: (n, 0, 0)),   # x
                pl.BlockSpec((tb, H, W), lambda n: (n, 0, 0))]   # target
    if use_blur:
        r = (blur_size - 1) // 2
        operands += [_band_matrix(H, r), _band_matrix(W, r)]
        in_specs += [pl.BlockSpec((H, H), lambda n: (0, 0)),     # Bh (resident)
                     pl.BlockSpec((W, W), lambda n: (0, 0))]     # Bw (resident)
    if use_gauss:
        gauss = gaussian_2d([gauss_params[0], gauss_params[1]],
                            min_value=gauss_params[2], max_value=gauss_params[3],
                            sigma=gauss_params[4]).astype(jnp.float32)
        operands.append(gauss)
        in_specs.append(pl.BlockSpec((H, W), lambda n: (0, 0)))  # gauss (resident)

    # VMEM budget: 2 inputs x 2 pipeline buffers + in-kernel temporaries
    # (loss, conv, cw, bh_b, ...) ~ 14x block, plus residents, plus headroom.
    block_bytes = tb * H * W * 4
    resident_bytes = 4 * (H * H + W * W + H * W)
    needed = 14 * block_bytes + 2 * resident_bytes + (4 << 20)
    vmem_limit = int(min(max(needed, 32 << 20), int(0.8 * vmem_cap)))

    kernel = functools.partial(
        _wbce_kernel,
        wp=float(weight_positive), wn=float(weight_negative),
        blur_k=int(blur_size), use_blur=use_blur, use_gauss=use_gauss,
        hard_labels=bool(hard_labels), slab_out=slab_out)

    partials = pl.pallas_call(
        kernel,
        out_shape=jax.ShapeDtypeStruct((num_blocks, 8, 128), jnp.float32),
        grid_spec=pltpu.PrefetchScalarGridSpec(
            num_scalar_prefetch=0,
            grid=(num_blocks,),
            in_specs=in_specs,
            out_specs=pl.BlockSpec((1, 8, 128), lambda n: (n, 0, 0)),
        ),
        compiler_params=pltpu.CompilerParams(
            dimension_semantics=("parallel",),
            vmem_limit_bytes=vmem_limit),
    )(*operands)

    if slab_out:
        total = jnp.sum(partials)
    else:
        total = jnp.sum(partials[:, 0, 0])
    return total / jnp.float32(N * C * H * W)


# ---------------------------------------------------------------------------
# Pure-JAX reference (mirrors the PyTorch forward)
# ---------------------------------------------------------------------------
def reference_loss(input_logits, target, *, weight_positive, weight_negative,
                   gauss_params=None, blur_use=True, blur_size=9):
    x = input_logits.astype(jnp.float32)
    t = target.astype(jnp.float32)
    loss = -(weight_positive * t * jnp.log(x + 1e-8)
             + weight_negative * (1.0 - t) * jnp.log(1.0 - x + 1e-8))
    if blur_use:
        radius = (blur_size - 1) // 2
        blur_w = jnp.ones((1, 1, blur_size, blur_size), jnp.float32) / (blur_size ** 2)
        conv = jax.lax.conv_general_dilated(
            t, blur_w, window_strides=(1, 1),
            padding=[(radius, radius), (radius, radius)],
            dimension_numbers=("NCHW", "OIHW", "NCHW"))
        blur_pass = 1.0 + conv * (t < 0.5).astype(jnp.float32)
        loss = loss * blur_pass
    if gauss_params is not None:
        gauss = gaussian_2d([gauss_params[0], gauss_params[1]],
                            min_value=gauss_params[2], max_value=gauss_params[3],
                            sigma=gauss_params[4])[None]  # (1, H, W)
        loss = gauss * loss
    return jnp.mean(loss)


if __name__ == "__main__":
    key = jax.random.PRNGKey(0)
    k1, k2, k3, k4 = jax.random.split(key, 4)

    # --- Config A: blur + gauss, (2, 1, 16, 16); grid of 2 blocks. ----------
    N, C, H, W = 2, 1, 16, 16
    # Probabilities in (0, 1) — the loss takes log(input) directly.
    x = jax.random.uniform(k1, (N, C, H, W), jnp.float32, minval=0.01, maxval=0.99)
    t = (jax.random.uniform(k2, (N, C, H, W)) > 0.5).astype(jnp.float32)
    cfg = dict(weight_positive=2.0, weight_negative=1.0,
               gauss_params=[H, W, 0.5, 1.5, 4.0], blur_use=True, blur_size=9)

    loss = jax.block_until_ready(weighted_bce_loss2(x, t, **cfg))
    ref = reference_loss(x, t, **cfg)
    assert jnp.allclose(loss, ref, rtol=1e-5, atol=1e-5), (loss, ref)

    # Hard-label single-log fast path (exact for 0/1 targets).
    loss_hard = jax.block_until_ready(weighted_bce_loss2(x, t, hard_labels=True, **cfg))
    assert jnp.allclose(loss_hard, ref, rtol=1e-5, atol=1e-5), (loss_hard, ref)

    # --- Config B: blur only (no gauss operand), lane-dense slab output. ----
    N2, H2, W2 = 4, 16, 128
    x2 = jax.random.uniform(k3, (N2, 1, H2, W2), jnp.float32, minval=0.01, maxval=0.99)
    t2 = (jax.random.uniform(k4, (N2, 1, H2, W2)) > 0.5).astype(jnp.float32)
    cfg2 = dict(weight_positive=1.5, weight_negative=0.5,
                gauss_params=None, blur_use=True, blur_size=9)
    loss2 = jax.block_until_ready(weighted_bce_loss2(x2, t2, **cfg2))
    ref2 = reference_loss(x2, t2, **cfg2)
    assert jnp.allclose(loss2, ref2, rtol=1e-5, atol=1e-5), (loss2, ref2)

    print("KERNEL_OK")
</pallas_src>

<mosaic_0001>
module attributes {stable_mosaic.version = 11 : i64} {
  func.func @_wbce_kernel(%arg0: i32, %arg1: memref<1x16x16xf32, #tpu.memory_space<vmem>>, %arg2: memref<1x16x16xf32, #tpu.memory_space<vmem>>, %arg3: memref<16x16xf32, #tpu.memory_space<vmem>>, %arg4: memref<16x16xf32, #tpu.memory_space<vmem>>, %arg5: memref<16x16xf32, #tpu.memory_space<vmem>>, %arg6: memref<1x8x128xf32, #tpu.memory_space<vmem>>) attributes {dimension_semantics = [#tpu.dimension_semantics<parallel>], iteration_bounds = array<i64: 2>, scalar_prefetch = 0 : i64, scratch_operands = 0 : i64, tpu.core_type = #tpu.core_type<tc>, window_params = [{transform_indices = @transform_0, window_bounds = array<i64: 1, 16, 16>}, {transform_indices = @transform_1, window_bounds = array<i64: 1, 16, 16>}, {pipeline_mode = #tpu.pipeline_mode<synchronous>, transform_indices = @transform_2, window_bounds = array<i64: 16, 16>}, {pipeline_mode = #tpu.pipeline_mode<synchronous>, transform_indices = @transform_3, window_bounds = array<i64: 16, 16>}, {pipeline_mode = #tpu.pipeline_mode<synchronous>, transform_indices = @transform_4, window_bounds = array<i64: 16, 16>}, {transform_indices = @transform_5, window_bounds = array<i64: 1, 8, 128>}]} {
    %c0 = arith.constant 0 : index
    %c0_0 = arith.constant 0 : index
    %c0_1 = arith.constant 0 : index
    %0 = vector.load %arg1[%c0, %c0_0, %c0_1] : memref<1x16x16xf32, #tpu.memory_space<vmem>>, vector<1x16x16xf32>
    %c0_2 = arith.constant 0 : index
    %c0_3 = arith.constant 0 : index
    %c0_4 = arith.constant 0 : index
    %1 = vector.load %arg2[%c0_2, %c0_3, %c0_4] : memref<1x16x16xf32, #tpu.memory_space<vmem>>, vector<1x16x16xf32>
    %cst = arith.constant 2.000000e+00 : f32
    %2 = vector.broadcast %cst : f32 to vector<1x16x16xf32>
    %3 = arith.mulf %2, %1 : vector<1x16x16xf32>
    %cst_5 = arith.constant 9.99999993E-9 : f32
    %4 = vector.broadcast %cst_5 : f32 to vector<1x16x16xf32>
    %5 = arith.addf %0, %4 : vector<1x16x16xf32>
    %6 = math.log %5 : vector<1x16x16xf32>
    %7 = arith.mulf %3, %6 : vector<1x16x16xf32>
    %cst_6 = arith.constant 1.000000e+00 : f32
    %8 = vector.broadcast %cst_6 : f32 to vector<1x16x16xf32>
    %9 = arith.subf %8, %1 : vector<1x16x16xf32>
    %cst_7 = arith.constant 1.000000e+00 : f32
    %10 = vector.broadcast %cst_7 : f32 to vector<1x16x16xf32>
    %11 = arith.mulf %10, %9 : vector<1x16x16xf32>
    %cst_8 = arith.constant 1.000000e+00 : f32
    %12 = vector.broadcast %cst_8 : f32 to vector<1x16x16xf32>
    %13 = arith.subf %12, %0 : vector<1x16x16xf32>
    %cst_9 = arith.constant 9.99999993E-9 : f32
    %14 = vector.broadcast %cst_9 : f32 to vector<1x16x16xf32>
    %15 = arith.addf %13, %14 : vector<1x16x16xf32>
    %16 = math.log %15 : vector<1x16x16xf32>
    %17 = arith.mulf %11, %16 : vector<1x16x16xf32>
    %18 = arith.addf %7, %17 : vector<1x16x16xf32>
    %cst_10 = arith.constant 0.000000e+00 : f32
    %19 = vector.broadcast %cst_10 : f32 to vector<1x16x16xf32>
    %20 = arith.subf %19, %18 : vector<1x16x16xf32>
    %c0_11 = arith.constant 0 : index
    %c0_12 = arith.constant 0 : index
    %21 = vector.load %arg4[%c0_11, %c0_12] : memref<16x16xf32, #tpu.memory_space<vmem>>, vector<16x16xf32>
    %c0_13 = arith.constant 0 : index
    %c0_14 = arith.constant 0 : index
    %22 = vector.load %arg3[%c0_13, %c0_14] : memref<16x16xf32, #tpu.memory_space<vmem>>, vector<16x16xf32>
    %23 = vector.shape_cast %1 : vector<1x16x16xf32> to vector<16x16xf32>
    %cst_15 = arith.constant dense<0.000000e+00> : vector<16x16xf32>
    %24 = tpu.matmul %23, %21, %cst_15 {dimension_numbers = #tpu.dot_dimension_numbers<[1], [0], [0], [1], [0, 0, 1, 1], [], []>} : vector<16x16xf32>, vector<16x16xf32>, vector<16x16xf32> -> vector<16x16xf32>
    %25 = vector.shape_cast %24 : vector<16x16xf32> to vector<1x16x16xf32>
    %26 = vector.shape_cast %22 : vector<16x16xf32> to vector<1x16x16xf32>
    %cst_16 = arith.constant dense<0.000000e+00> : vector<1x16x16xf32>
    %27 = tpu.matmul %26, %25, %cst_16 {dimension_numbers = #tpu.dot_dimension_numbers<[2], [1], [1], [2], [0, 0, 0, 1, 1, 2], [0], [0]>} : vector<1x16x16xf32>, vector<1x16x16xf32>, vector<1x16x16xf32> -> vector<1x16x16xf32>
    %cst_17 = arith.constant 5.000000e-01 : f32
    %28 = vector.broadcast %cst_17 : f32 to vector<1x16x16xf32>
    %29 = arith.cmpf olt, %1, %28 : vector<1x16x16xf32>
    %cst_18 = arith.constant 0.0123456791 : f32
    %cst_19 = arith.constant 0.000000e+00 : f32
    %30 = vector.broadcast %cst_18 : f32 to vector<1x16x16xf32>
    %31 = vector.broadcast %cst_19 : f32 to vector<1x16x16xf32>
    %32 = arith.select %29, %30, %31 : vector<1x16x16xi1>, vector<1x16x16xf32>
    %33 = arith.mulf %27, %32 : vector<1x16x16xf32>
    %cst_20 = arith.constant 1.000000e+00 : f32
    %34 = vector.broadcast %cst_20 : f32 to vector<1x16x16xf32>
    %35 = arith.addf %34, %33 : vector<1x16x16xf32>
    %36 = arith.mulf %20, %35 : vector<1x16x16xf32>
    %c0_21 = arith.constant 0 : index
    %c0_22 = arith.constant 0 : index
    %37 = vector.load %arg5[%c0_21, %c0_22] : memref<16x16xf32, #tpu.memory_space<vmem>>, vector<16x16xf32>
    %38 = vector.shape_cast %37 : vector<16x16xf32> to vector<1x16x16xf32>
    %39 = arith.mulf %36, %38 : vector<1x16x16xf32>
    %40 = vector.shape_cast %39 : vector<1x16x16xf32> to vector<1x1x16x16xf32>
    %cst_23 = arith.constant dense<0.000000e+00> : vector<1xf32>
    %41 = vector.multi_reduction <add>, %40, %cst_23 [1, 2, 3] : vector<1x1x16x16xf32> to vector<1xf32>
    %42 = vector.shape_cast %41 : vector<1xf32> to vector<1x1x1x1xf32>
    %43 = vector.extract %42[0, 0, 0, 0] : f32 from vector<1x1x1x1xf32>
    %44 = vector.broadcast %43 : f32 to vector<1x8x128xf32>
    %c0_24 = arith.constant 0 : index
    %c0_25 = arith.constant 0 : index
    %c0_26 = arith.constant 0 : index
    %45 = vector.load %arg6[%c0_24, %c0_25, %c0_26] : memref<1x8x128xf32, #tpu.memory_space<vmem>>, vector<1x8x128xf32>
    tpu.vector_store %arg6[%c0_24, %c0_25, %c0_26], %44 {strides = array<i32>} : memref<1x8x128xf32, #tpu.memory_space<vmem>>, vector<1x8x128xf32>,
    return
  }
  func.func @transform_0(%arg0: i32) -> (i32, i32, i32) {
    %c0_i32 = arith.constant 0 : i32
    %c0_i32_0 = arith.constant 0 : i32
    %c0_i32_1 = arith.constant 0 : i32
    return %arg0, %c0_i32, %c0_i32_0 : i32, i32, i32
  }
  func.func @transform_1(%arg0: i32) -> (i32, i32, i32) {
    %c0_i32 = arith.constant 0 : i32
    %c0_i32_0 = arith.constant 0 : i32
    %c0_i32_1 = arith.constant 0 : i32
    return %arg0, %c0_i32, %c0_i32_0 : i32, i32, i32
  }
  func.func @transform_2(%arg0: i32) -> (i32, i32) {
    %c0_i32 = arith.constant 0 : i32
    %c0_i32_0 = arith.constant 0 : i32
    %c0_i32_1 = arith.constant 0 : i32
    return %c0_i32, %c0_i32_0 : i32, i32
  }
  func.func @transform_3(%arg0: i32) -> (i32, i32) {
    %c0_i32 = arith.constant 0 : i32
    %c0_i32_0 = arith.constant 0 : i32
    %c0_i32_1 = arith.constant 0 : i32
    return %c0_i32, %c0_i32_0 : i32, i32
  }
  func.func @transform_4(%arg0: i32) -> (i32, i32) {
    %c0_i32 = arith.constant 0 : i32
    %c0_i32_0 = arith.constant 0 : i32
    %c0_i32_1 = arith.constant 0 : i32
    return %c0_i32, %c0_i32_0 : i32, i32
  }
  func.func @transform_5(%arg0: i32) -> (i32, i32, i32) {
    %c0_i32 = arith.constant 0 : i32
    %c0_i32_0 = arith.constant 0 : i32
    %c0_i32_1 = arith.constant 0 : i32
    return %arg0, %c0_i32, %c0_i32_0 : i32, i32, i32
  }
}

</mosaic_0001>

<llo_original>
// kernel: tpu_custom_call.1
$region0: #{tpu_custom_call.1}
  #allocation0 [shape = 'u32[]', space=smem, size = 0x4, offset = 0x4, fixed_abs, tag = 'smem constant byte address 0x4 - core index']
  #allocation1 [shape = 'u32[72,128]{1,0:T(1,128)}', space=vmem, size = 0x9000, scoped, tag = 'internal scratch']
  %s0 = inlined_call_operand.hbm [shape: f32[2,16,16], index: 0, kind: input, shape index: {}]
  %s1 = inlined_call_operand.hbm [shape: f32[2,16,16], index: 1, kind: input, shape index: {}]
  %s2 = inlined_call_operand.hbm [shape: f32[16,16], index: 2, kind: input, shape index: {}]
  %s3 = inlined_call_operand.hbm [shape: f32[16,16], index: 3, kind: input, shape index: {}]
  %s4 = inlined_call_operand.hbm [shape: f32[16,16], index: 4, kind: input, shape index: {}]
  %s5 = inlined_call_operand.hbm [shape: f32[2,8,128], index: 5, kind: output, shape index: {}]
  %s6 = sld [smem:[#allocation0]]
  $region73: #{tpu_custom_call.1} parent=0
    _
  %s8 = ssub.s32 1, %s6
  %s9 = scalar_select 0, %s8, %s6
  $region1: #{tpu_custom_call.1} parent=0
    #allocation2 [shape = 'u8[16384]{0}', space=vmem, size = 0x4000, scoped, tag = 'input window, operand 0']
    #allocation3 [shape = 's32[2]{0}', space=sflag, size = 0x8, scoped, tag = 'scoped memory for tpu_custom_call.1']
    #allocation4 [shape = 's32[2]{0}', space=sflag, size = 0x8, scoped, tag = 'scoped memory for tpu_custom_call.1']
    #allocation5 [shape = 'u8[16384]{0}', space=vmem, size = 0x4000, scoped, tag = 'input window, operand 1']
    #allocation6 [shape = 's32[2]{0}', space=sflag, size = 0x8, scoped, tag = 'scoped memory for tpu_custom_call.1']
    #allocation7 [shape = 'u8[8192]{0}', space=vmem, size = 0x2000, scoped, tag = 'input window, operand 2, single buffered']
    #allocation8 [shape = 'u8[8192]{0}', space=vmem, size = 0x2000, scoped, tag = 'input window, operand 3, single buffered']
    #allocation9 [shape = 's32[1]{0}', space=sflag, size = 0x4, scoped, tag = 'scoped memory for tpu_custom_call.1']
    #allocation10 [shape = 'u8[8192]{0}', space=vmem, size = 0x2000, scoped, tag = 'input window, operand 4, single buffered']
    #allocation11 [shape = 'u8[8192]{0}', space=vmem, size = 0x2000, scoped, tag = 'output window, operand 0']
    %10 = vsyncpa [#allocation3], 0
    %s11 = scalar_lea.sflag [#allocation3], 1
    %12 = vsyncpa %s11, 0
    %13 = vsyncpa [#allocation6], 0
    %s14 = scalar_lea.sflag [#allocation6], 1
    %15 = vsyncpa %s14, 0
    %16 = vsyncpa [#allocation9], 0
    %17 = vsyncpa [#allocation4], 0
    %s18 = scalar_lea.sflag [#allocation4], 1
    %19 = vsyncpa %s18, 0
    loop: start=0, step=1, limit=4
    $region2: #{tpu_custom_call.1} parent=1 // loop_pre_header
      _
    $region3: #{tpu_custom_call.1} parent=1 // loop_header
      %s21 = sphi 0, %s25
      %p22 = scmp.ge.s32.totalorder %s21, 4
      %s31 = sphi 0, %s33
      %s34 = sphi 0, %s31
      %s35 = sphi 0, %s34
      %s51 = sphi 0, %s35
      %s57 = sphi 0, %s59
      %s60 = sphi 0, %s57
      %s61 = sphi 0, %s60
      %s77 = sphi 0, %s61
      %s81 = sphi 0, %s81
      %s83 = sphi 0, %s81
      %s84 = sphi 0, %s83
      %s98 = sphi 0, %s84
      %s102 = sphi 0, %s102
      %s104 = sphi 0, %s102
      %s105 = sphi 0, %s104
      %s119 = sphi 0, %s105
      %s123 = sphi 0, %s123
      %s125 = sphi 0, %s123
      %s126 = sphi 0, %s125
      %s140 = sphi 0, %s126
      %s146 = sphi 0, %s148
      %s149 = sphi 0, %s146
      %s150 = sphi 0, %s149
      %s166 = sphi 0, %s150
    $region4: #{tpu_custom_call.1} parent=1 // loop_header_branch
      %24 = sbr.rel (%p22) target = $region8
    $region5: #{tpu_custom_call.1} parent=1 // loop_body
      %s26 = ssub.s32 %s21, 1
      %s27 = ssub.s32 %s21, 2
      %s28 = sadd.s32 %s21, 1
      %s29 = ssub.s32 %s21, %s28
      %p30 = scmp.eq.s32.totalorder %s29, 0
      %s32 = sadd.s32 %s31, 1
      %s33 = scalar_select %p30, %s31, %s32
      %p36 = pneg %p30
      %p37 = scmp.eq.s32.totalorder %s21, 1
      %p38 = por %p36, %p37
      %p39 = scmp.ne.s32.totalorder %s31, %s34
      %p40 = scmp.eq.s32.totalorder %s21, 0
      %p41 = por %p39, %p40
      %p42 = scmp.ne.s32.totalorder %s31, %s34
      %p43 = scmp.eq.s32.totalorder %s26, 1
      %p44 = por %p42, %p43
      %p45 = scmp.ne.s32.totalorder %s34, %s35
      %p46 = scmp.eq.s32.totalorder %s26, 0
      %p47 = por %p45, %p46
      %p48 = scmp.ne.s32.totalorder %s34, %s35
      %p49 = scmp.eq.s32.totalorder %s27, 1
      %p50 = por %p48, %p49
      %p52 = scmp.ne.s32.totalorder %s35, %s51
      %p53 = scmp.eq.s32.totalorder %s27, 0
      %p54 = por %p52, %p53
      %s55 = ssub.s32 %s21, %s28
      %p56 = scmp.eq.s32.totalorder %s55, 0
      %s58 = sadd.s32 %s57, 1
      %s59 = scalar_select %p56, %s57, %s58
      %p62 = pneg %p56
      %p63 = scmp.eq.s32.totalorder %s21, 1
      %p64 = por %p62, %p63
      %p65 = scmp.ne.s32.totalorder %s57, %s60
      %p66 = scmp.eq.s32.totalorder %s21, 0
      %p67 = por %p65, %p66
      %p68 = scmp.ne.s32.totalorder %s57, %s60
      %p69 = scmp.eq.s32.totalorder %s26, 1
      %p70 = por %p68, %p69
      %p71 = scmp.ne.s32.totalorder %s60, %s61
      %p72 = scmp.eq.s32.totalorder %s26, 0
      %p73 = por %p71, %p72
      %p74 = scmp.ne.s32.totalorder %s60, %s61
      %p75 = scmp.eq.s32.totalorder %s27, 1
      %p76 = por %p74, %p75
      %p78 = scmp.ne.s32.totalorder %s61, %s77
      %p79 = scmp.eq.s32.totalorder %s27, 0
      %p80 = por %p78, %p79
      %s82 = sadd.s32 %s81, 1
      %p85 = scmp.eq.s32.totalorder %s21, 1
      %p86 = scmp.ne.s32.totalorder %s81, %s83
      %p87 = scmp.eq.s32.totalorder %s21, 0
      %p88 = por %p86, %p87
      %p89 = scmp.ne.s32.totalorder %s81, %s83
      %p90 = scmp.eq.s32.totalorder %s26, 1
      %p91 = por %p89, %p90
      %p92 = scmp.ne.s32.totalorder %s83, %s84
      %p93 = scmp.eq.s32.totalorder %s26, 0
      %p94 = por %p92, %p93
      %p95 = scmp.ne.s32.totalorder %s83, %s84
      %p96 = scmp.eq.s32.totalorder %s27, 1
      %p97 = por %p95, %p96
      %p99 = scmp.ne.s32.totalorder %s84, %s98
      %p100 = scmp.eq.s32.totalorder %s27, 0
      %p101 = por %p99, %p100
      %s103 = sadd.s32 %s102, 1
      %p106 = scmp.eq.s32.totalorder %s21, 1
      %p107 = scmp.ne.s32.totalorder %s102, %s104
      %p108 = scmp.eq.s32.totalorder %s21, 0
      %p109 = por %p107, %p108
      %p110 = scmp.ne.s32.totalorder %s102, %s104
      %p111 = scmp.eq.s32.totalorder %s26, 1
      %p112 = por %p110, %p111
      %p113 = scmp.ne.s32.totalorder %s104, %s105
      %p114 = scmp.eq.s32.totalorder %s26, 0
      %p115 = por %p113, %p114
      %p116 = scmp.ne.s32.totalorder %s104, %s105
      %p117 = scmp.eq.s32.totalorder %s27, 1
      %p118 = por %p116, %p117
      %p120 = scmp.ne.s32.totalorder %s105, %s119
      %p121 = scmp.eq.s32.totalorder %s27, 0
      %p122 = por %p120, %p121
      %s124 = sadd.s32 %s123, 1
      %p127 = scmp.eq.s32.totalorder %s21, 1
      %p128 = scmp.ne.s32.totalorder %s123, %s125
      %p129 = scmp.eq.s32.totalorder %s21, 0
      %p130 = por %p128, %p129
      %p131 = scmp.ne.s32.totalorder %s123, %s125
      %p132 = scmp.eq.s32.totalorder %s26, 1
      %p133 = por %p131, %p132
      %p134 = scmp.ne.s32.totalorder %s125, %s126
      %p135 = scmp.eq.s32.totalorder %s26, 0
      %p136 = por %p134, %p135
      %p137 = scmp.ne.s32.totalorder %s125, %s126
      %p138 = scmp.eq.s32.totalorder %s27, 1
      %p139 = por %p137, %p138
      %p141 = scmp.ne.s32.totalorder %s126, %s140
      %p142 = scmp.eq.s32.totalorder %s27, 0
      %p143 = por %p141, %p142
      %s144 = ssub.s32 %s21, %s28
      %p145 = scmp.eq.s32.totalorder %s144, 0
      %s147 = sadd.s32 %s146, 1
      %s148 = scalar_select %p145, %s146, %s147
      %p151 = pneg %p145
      %p152 = scmp.eq.s32.totalorder %s21, 1
      %p153 = por %p151, %p152
      %p154 = scmp.ne.s32.totalorder %s146, %s149
      %p155 = scmp.eq.s32.totalorder %s21, 0
      %p156 = por %p154, %p155
      %p157 = scmp.ne.s32.totalorder %s146, %s149
      %p158 = scmp.eq.s32.totalorder %s26, 1
      %p159 = por %p157, %p158
      %p160 = scmp.ne.s32.totalorder %s149, %s150
      %p161 = scmp.eq.s32.totalorder %s26, 0
      %p162 = por %p160, %p161
      %p163 = scmp.ne.s32.totalorder %s149, %s150
      %p164 = scmp.eq.s32.totalorder %s27, 1
      %p165 = por %p163, %p164
      %p167 = scmp.ne.s32.totalorder %s150, %s166
      %p168 = scmp.eq.s32.totalorder %s27, 0
      %p169 = por %p167, %p168
      %p170 = scmp.le.s32.totalorder 1, %s21
      %p171 = scmp.lt.s32.totalorder %s21, 3
      %p172 = pnand %p170, %p171
      %p173 = pneg %p172
      // Predicated region
      $region9: #{tpu_custom_call.1} parent=5 // pred_check
        _
      $region10: #{tpu_custom_call.1} parent=5 // pred_check_branch
        %175 = sbr.rel (%p172) target = $region12
      $region11: #{tpu_custom_call.1} parent=5 // pred_region
        %s176 = ssub.s32 %s21, 1
        // Predicated region
        $region13: #{tpu_custom_call.1} parent=11 // pred_check
          %p177 = pneg %p94
        $region14: #{tpu_custom_call.1} parent=11 // pred_check_branch
          %179 = sbr.rel (%p177) target = $region16
        $region15: #{tpu_custom_call.1} parent=11 // pred_region
          %181 = vsyncadd [#allocation6], 0
          %s182 = sshll.u32 %s2, 4
          %s183 = int_to_ptr.hbm [resolvable:$true] %s182
          %s184 = sshll.u32 [#allocation7], 4
          %s185 = int_to_ptr.vmem [resolvable:$true] %s184
          %190 = dma.hbm_to_vmem [thread:$0]  %s183, 256, %s185, [#allocation6], 128, 128, 8
        $region16: #{tpu_custom_call.1} parent=11 // pred_fallthru
          _
        // Predicated region
        $region17: #{tpu_custom_call.1} parent=11 // pred_check
          %p191 = pneg %p115
        $region18: #{tpu_custom_call.1} parent=11 // pred_check_branch
          %193 = sbr.rel (%p191) target = $region20
        $region19: #{tpu_custom_call.1} parent=11 // pred_region
          %195 = vsyncadd [#allocation9], 0
          %s196 = sshll.u32 %s3, 4
          %s197 = int_to_ptr.hbm [resolvable:$true] %s196
          %s198 = sshll.u32 [#allocation8], 4
          %s199 = int_to_ptr.vmem [resolvable:$true] %s198
          %204 = dma.hbm_to_vmem [thread:$0]  %s197, 256, %s199, [#allocation9], 128, 128, 8
        $region20: #{tpu_custom_call.1} parent=11 // pred_fallthru
          _
        // Predicated region
        $region21: #{tpu_custom_call.1} parent=11 // pred_check
          %p205 = pneg %p136
        $region22: #{tpu_custom_call.1} parent=11 // pred_check_branch
          %207 = sbr.rel (%p205) target = $region24
        $region23: #{tpu_custom_call.1} parent=11 // pred_region
          %209 = vsyncadd [#allocation9], 0
          %s210 = sshll.u32 %s4, 4
          %s211 = int_to_ptr.hbm [resolvable:$true] %s210
          %s212 = sshll.u32 [#allocation10], 4
          %s213 = int_to_ptr.vmem [resolvable:$true] %s212
          %218 = dma.hbm_to_vmem [thread:$0]  %s211, 256, %s213, [#allocation9], 128, 128, 8
        $region24: #{tpu_custom_call.1} parent=11 // pred_fallthru
          _
      $region12: #{tpu_custom_call.1} parent=5 // pred_fallthru
        _
      %p219 = scmp.lt.s32.totalorder %s21, 2
      // Predicated region
      $region25: #{tpu_custom_call.1} parent=5 // pred_check
        %p220 = pneg %p219
      $region26: #{tpu_custom_call.1} parent=5 // pred_check_branch
        %222 = sbr.rel (%p220) target = $region28
      $region27: #{tpu_custom_call.1} parent=5 // pred_region
        // Predicated region
        $region29: #{tpu_custom_call.1} parent=27 // pred_check
          %p223 = pneg %p41
        $region30: #{tpu_custom_call.1} parent=27 // pred_check_branch
          %225 = sbr.rel (%p223) target = $region32
        $region31: #{tpu_custom_call.1} parent=27 // pred_region
          %s226 = sand.u32 %s31, 1
          %s227 = scalar_lea.sflag [#allocation3], %s226
          %s228 = sand.u32 %s31, 1
          %s229 = smul.addr %s228, 16
          %s230 = scalar_lea.vmem [#allocation2], %s229
          %232 = vsyncadd %s227, 0
          %s233 = smul.addr %s21, 2
          %s234 = smul.addr %s233, 8
          %s235 = scalar_lea.hbm %s0, %s234
          %s236 = sshll.u32 %s235, 4
          %s237 = int_to_ptr.hbm [resolvable:$true] %s236
          %s238 = sshll.u32 %s230, 4
          %s239 = int_to_ptr.vmem [resolvable:$true] %s238
          %244 = dma.hbm_to_vmem [thread:$0]  %s237, 256, %s239, %s227, 128, 128, 8
        $region32: #{tpu_custom_call.1} parent=27 // pred_fallthru
          _
        // Predicated region
        $region33: #{tpu_custom_call.1} parent=27 // pred_check
          %p245 = pneg %p67
        $region34: #{tpu_custom_call.1} parent=27 // pred_check_branch
          %247 = sbr.rel (%p245) target = $region36
        $region35: #{tpu_custom_call.1} parent=27 // pred_region
          %s248 = sand.u32 %s21, 1
          %s249 = scalar_lea.sflag [#allocation6], %s248
          %s250 = sand.u32 %s57, 1
          %s251 = smul.addr %s250, 16
          %s252 = scalar_lea.vmem [#allocation5], %s251
          %254 = vsyncadd %s249, 0
          %s255 = smul.addr %s21, 2
          %s256 = smul.addr %s255, 8
          %s257 = scalar_lea.hbm %s1, %s256
          %s258 = sshll.u32 %s257, 4
          %s259 = int_to_ptr.hbm [resolvable:$true] %s258
          %s260 = sshll.u32 %s252, 4
          %s261 = int_to_ptr.vmem [resolvable:$true] %s260
          %266 = dma.hbm_to_vmem [thread:$0]  %s259, 256, %s261, %s249, 128, 128, 8
        $region36: #{tpu_custom_call.1} parent=27 // pred_fallthru
          _
      $region28: #{tpu_custom_call.1} parent=5 // pred_fallthru
        _
      %p267 = scmp.le.s32.totalorder 1, %s21
      %p268 = scmp.lt.s32.totalorder %s21, 3
      %p269 = pnand %p267, %p268
      %p270 = pneg %p269
      // Predicated region
      $region37: #{tpu_custom_call.1} parent=5 // pred_check
        _
      $region38: #{tpu_custom_call.1} parent=5 // pred_check_branch
        %272 = sbr.rel (%p269) target = $region40
      $region39: #{tpu_custom_call.1} parent=5 // pred_region
        %s273 = ssub.s32 %s21, 1
        %s274 = sand.u32 %s34, 1
        %s275 = scalar_lea.sflag [#allocation3], %s274
        %s276 = sand.u32 %s34, 1
        %s277 = smul.addr %s276, 16
        %s278 = scalar_lea.vmem [#allocation2], %s277
        // Predicated region
        $region41: #{tpu_custom_call.1} parent=39 // pred_check
          %p279 = pneg %p47
        $region42: #{tpu_custom_call.1} parent=39 // pred_check_branch
          %281 = sbr.rel (%p279) target = $region44
        $region43: #{tpu_custom_call.1} parent=39 // pred_region
          %283 = dma.done %s275, 256
        $region44: #{tpu_custom_call.1} parent=39 // pred_fallthru
          _
        %s284 = sand.u32 %s26, 1
        %s285 = scalar_lea.sflag [#allocation6], %s284
        %s286 = sand.u32 %s60, 1
        %s287 = smul.addr %s286, 16
        %s288 = scalar_lea.vmem [#allocation5], %s287
        // Predicated region
        $region45: #{tpu_custom_call.1} parent=39 // pred_check
          %p289 = pneg %p73
        $region46: #{tpu_custom_call.1} parent=39 // pred_check_branch
          %291 = sbr.rel (%p289) target = $region48
        $region47: #{tpu_custom_call.1} parent=39 // pred_region
          %293 = dma.done %s285, 256
        $region48: #{tpu_custom_call.1} parent=39 // pred_fallthru
          _
        // Predicated region
        $region49: #{tpu_custom_call.1} parent=39 // pred_check
          %p294 = pneg %p94
        $region50: #{tpu_custom_call.1} parent=39 // pred_check_branch
          %296 = sbr.rel (%p294) target = $region52
        $region51: #{tpu_custom_call.1} parent=39 // pred_region
          %298 = dma.done [#allocation6], 256
        $region52: #{tpu_custom_call.1} parent=39 // pred_fallthru
          _
        // Predicated region
        $region53: #{tpu_custom_call.1} parent=39 // pred_check
          %p299 = pneg %p115
        $region54: #{tpu_custom_call.1} parent=39 // pred_check_branch
          %301 = sbr.rel (%p299) target = $region56
        $region55: #{tpu_custom_call.1} parent=39 // pred_region
          %303 = dma.done [#allocation9], 256
        $region56: #{tpu_custom_call.1} parent=39 // pred_fallthru
          _
        // Predicated region
        $region57: #{tpu_custom_call.1} parent=39 // pred_check
          %p304 = pneg %p136
        $region58: #{tpu_custom_call.1} parent=39 // pred_check_branch
          %306 = sbr.rel (%p304) target = $region60
        $region59: #{tpu_custom_call.1} parent=39 // pred_region
          %308 = dma.done [#allocation9], 256
        $region60: #{tpu_custom_call.1} parent=39 // pred_fallthru
          _
        %s309 = sand.u32 %s34, 1
        %s310 = scalar_lea.sflag [#allocation3], %s309
        %s311 = sand.u32 %s34, 1
        %s312 = smul.addr %s311, 16
        %s313 = scalar_lea.vmem [#allocation2], %s312
        %p314 = pneg %p47
        %p315 = pneg %p44
        %s316 = sand.u32 %s26, 1
        %s317 = scalar_lea.sflag [#allocation6], %s316
        %s318 = sand.u32 %s60, 1
        %s319 = smul.addr %s318, 16
        %s320 = scalar_lea.vmem [#allocation5], %s319
        %p321 = pneg %p73
        %p322 = pneg %p70
        %p323 = pneg %p94
        %p324 = pneg %p91
        %p325 = pneg %p115
        %p326 = pneg %p112
        %p327 = pneg %p136
        %p328 = pneg %p133
        %p329 = pneg %p162
        %p330 = pneg %p159
        %s331 = sand.u32 %s149, 1
        %s332 = scalar_lea.sflag [#allocation4], %s331
        %s333 = sand.u32 %s149, 1
        %s334 = smul.addr %s333, 8
        %s335 = scalar_lea.vmem [#allocation11], %s334
        %v336 = vld [vmem:[%s278] sm:$0xff]
        %v337 = vld [vmem:[%s278 + $0x8] sm:$0xff]
        %v338 = vld [vmem:[%s288] sm:$0xff]
        %v339 = vld [vmem:[%s288 + $0x8] sm:$0xff]
        %v340 = vmul.f32 %v338, 2.0
        %v341 = vmul.f32 %v339, 2.0
        %v342 = vadd.f32 %v336, 1e-08
        %v343 = vadd.f32 %v337, 1e-08
        %v344 = vlog2.pop %v342
        %v345 = vmul.f32 %v344, 0.6931472
        %v346 = vlog2.pop %v343
        %v347 = vmul.f32 %v346, 0.6931472
        %v348 = vmul.f32 %v340, %v345
        %v349 = vmul.f32 %v341, %v347
        %v350 = vsub.f32 1.0, %v338
        %v351 = vsub.f32 1.0, %v339
        %v352 = vsub.f32 1.0, %v336
        %v353 = vsub.f32 1.0, %v337
        %v354 = vadd.f32 %v352, 1e-08
        %v355 = vadd.f32 %v353, 1e-08
        %v356 = vlog2.pop %v354
        %v357 = vmul.f32 %v356, 0.6931472
        %v358 = vlog2.pop %v355
        %v359 = vmul.f32 %v358, 0.6931472
        %v360 = vmul.f32 %v350, %v357
        %v361 = vmul.f32 %v351, %v359
        %v362 = vadd.f32 %v348, %v360
        %v363 = vadd.f32 %v349, %v361
        %v364 = vsub.f32 0.0, %v362
        %v365 = vsub.f32 0.0, %v363
        %v366 = vld [vmem:[#allocation8] sm:$0xff]
        %v367 = vld [vmem:[#allocation8 + $0x8] sm:$0xff]
        %v368 = vld [vmem:[#allocation7] sm:$0xff]
        %v369 = vld [vmem:[#allocation7 + $0x8] sm:$0xff]
        %vm370 = vcmask 130048
        %v372 = vsel %vm370, %v338, 0
        %v375 = vsel %vm370, %v339, 0
        %377 = vmatpush.msra.mxu0 0.0
        %378 = vmatpush.msra.mxu0 0.0
        %379 = vmatpush.msra.mxu0 0.0
        %380 = vmatpush.msra.mxu0 0.0
        %381 = vmatpush.msra.mxu0 0.0
        %382 = vmatpush.msra.mxu0 0.0
        %383 = vmatpush.msra.mxu0 0.0
        %384 = vmatpush.msra.mxu0 0.0
        %385 = vmatpush.msra.mxu0 0.0
        %386 = vmatpush.msra.mxu0 0.0
        %387 = vmatpush.msra.mxu0 0.0
        %388 = vmatpush.msra.mxu0 0.0
        %389 = vmatpush.msra.mxu0 0.0
        %390 = vmatpush.msra.mxu0 0.0
        %391 = vmatpush.msra.mxu0 %v367
        %392 = vmatpush.msra.mxu0 %v366
        %393 = vmatmul.f32.gmra.mxu0 %v372
        %v394 = vpop.f32.mrf.mxu0
        %v395 = vadd.f32 0.0, %v394
        %396 = vmatmul.f32.gmra.mxu0 %v375
        %v397 = vpop.f32.mrf.mxu0
        %v398 = vadd.f32 0.0, %v397
        %399 = vdwg.mxu0
        %v401 = vsel %vm370, %v368, 0
        %v404 = vsel %vm370, %v369, 0
        %406 = vmatpush.msra.mxu0 0.0
        %407 = vmatpush.msra.mxu0 0.0
        %408 = vmatpush.msra.mxu0 0.0
        %409 = vmatpush.msra.mxu0 0.0
        %410 = vmatpush.msra.mxu0 0.0
        %411 = vmatpush.msra.mxu0 0.0
        %412 = vmatpush.msra.mxu0 0.0
        %413 = vmatpush.msra.mxu0 0.0
        %414 = vmatpush.msra.mxu0 0.0
        %415 = vmatpush.msra.mxu0 0.0
        %416 = vmatpush.msra.mxu0 0.0
        %417 = vmatpush.msra.mxu0 0.0
        %418 = vmatpush.msra.mxu0 0.0
        %419 = vmatpush.msra.mxu0 0.0
        %420 = vmatpush.msra.mxu0 %v398
        %421 = vmatpush.msra.mxu0 %v395
        %422 = vmatmul.f32.gmra.mxu0 %v401
        %v423 = vpop.f32.mrf.mxu0
        %v424 = vadd.f32 0.0, %v423
        %425 = vmatmul.f32.gmra.mxu0 %v404
        %v426 = vpop.f32.mrf.mxu0
        %v427 = vadd.f32 0.0, %v426
        %428 = vdwg.mxu0
        %vm429 = vcmp.lt.f32.partialorder %v338, 0.5
        %vm430 = vcmp.lt.f32.partialorder %v339, 0.5
        %v431 = vsel %vm429, 0.012345679, 0.0
        %v432 = vsel %vm430, 0.012345679, 0.0
        %v433 = vmul.f32 %v424, %v431
        %v434 = vmul.f32 %v427, %v432
        %v435 = vadd.f32 %v433, 1.0
        %v436 = vadd.f32 %v434, 1.0
        %v437 = vmul.f32 %v364, %v435
        %v438 = vmul.f32 %v365, %v436
        %v439 = vld [vmem:[#allocation10] sm:$0xff]
        %v440 = vld [vmem:[#allocation10 + $0x8] sm:$0xff]
        %v441 = vmul.f32 %v437, %v439
        %v442 = vmul.f32 %v438, %v440
        %v443 = vsel %vm370, %v441, 0.0
        %v444 = vsel %vm370, %v442, 0.0
        %v445 = vadd.f32 %v443, %v444
        %446 = vadd.xlane.f32.xlu0 %v445
        %v447 = vpop.xlane.xlu0 %446
        %v448 = vrot.slane %v447, 4
        %v449 = vadd.f32 %v447, %v448
        %v450 = vrot.slane %v449, 2
        %v451 = vadd.f32 %v449, %v450
        %v452 = vrot.slane %v451, 1
        %v453 = vadd.f32 %v451, %v452
        %s454 = vtos %v453
        %v455 = vstv %s454
        %456 = vst [vmem:[%s335] sm:$0xff] %v455
        %s457 = sand.u32 %s149, 1
        %s458 = scalar_lea.sflag [#allocation4], %s457
        %s459 = sand.u32 %s149, 1
        %s460 = smul.addr %s459, 8
        %s461 = scalar_lea.vmem [#allocation11], %s460
        // Predicated region
        $region61: #{tpu_custom_call.1} parent=39 // pred_check
          %p462 = pneg %p159
        $region62: #{tpu_custom_call.1} parent=39 // pred_check_branch
          %464 = sbr.rel (%p462) target = $region64
        $region63: #{tpu_custom_call.1} parent=39 // pred_region
          %466 = vsyncadd %s458, 0
          %s467 = smul.addr %s26, 8
          %s468 = scalar_lea.hbm %s5, %s467
          %s470 = sshll.u32 %s461, 4
          %s471 = int_to_ptr.vmem [resolvable:$true] %s470
          %s472 = sshll.u32 %s468, 4
          %s473 = int_to_ptr.hbm [resolvable:$true] %s472
          %475 = dma.vmem_to_hbm [thread:$0]  %s471, 128, %s473, %s458
        $region64: #{tpu_custom_call.1} parent=39 // pred_fallthru
          _
      $region40: #{tpu_custom_call.1} parent=5 // pred_fallthru
        _
      %p476 = scmp.le.s32.totalorder 2, %s21
      // Predicated region
      $region65: #{tpu_custom_call.1} parent=5 // pred_check
        %p477 = pneg %p476
      $region66: #{tpu_custom_call.1} parent=5 // pred_check_branch
        %479 = sbr.rel (%p477) target = $region68
      $region67: #{tpu_custom_call.1} parent=5 // pred_region
        %s480 = ssub.s32 %s21, 2
        // Predicated region
        $region69: #{tpu_custom_call.1} parent=67 // pred_check
          %p481 = pneg %p165
        $region70: #{tpu_custom_call.1} parent=67 // pred_check_branch
          %483 = sbr.rel (%p481) target = $region72
        $region71: #{tpu_custom_call.1} parent=67 // pred_region
          %s484 = sand.u32 %s150, 1
          %s485 = scalar_lea.sflag [#allocation4], %s484
          %s486 = sand.u32 %s150, 1
          %s487 = smul.addr %s486, 8
          %s488 = scalar_lea.vmem [#allocation11], %s487
          %490 = dma.done %s485, 128
        $region72: #{tpu_custom_call.1} parent=67 // pred_fallthru
          _
      $region68: #{tpu_custom_call.1} parent=5 // pred_fallthru
        _
    $region6: #{tpu_custom_call.1} parent=1 // loop_footer
      %s25 = sadd.s32 1, %s21
    $region7: #{tpu_custom_call.1} parent=1 // loop_footer_branch
      %20 = sbr.rel target = $region3
    $region8: #{tpu_custom_call.1} parent=1 // loop_exit
      _
    %491 = vsyncpa [#allocation3], 1
    %s492 = scalar_lea.sflag [#allocation3], 1
    %493 = vsyncpa %s492, 1
    %494 = vsyncpa [#allocation6], 1
    %s495 = scalar_lea.sflag [#allocation6], 1
    %496 = vsyncpa %s495, 1
    %497 = vsyncpa [#allocation9], 1
    %498 = vsyncpa [#allocation4], 1
    %s499 = scalar_lea.sflag [#allocation4], 1
    %500 = vsyncpa %s499, 1

</llo_original>
